<compile_context>
chip_gen: v7x
topology: tpu7x:2x2x1
jax: 0.10.0
libtpu: 0.0.40
codegen_flags: <defaults>
</compile_context>

<pallas_src>
import jax
import jax.numpy as jnp
from jax.experimental import pallas as pl
from jax.experimental.pallas import tpu as pltpu


def _bfn_forward_kernel(theta_ref, tb_ref, w_ref, out_ref):
    # theta_ref: (1, td, 128) packed theta rows (P = 128//K positions per lane row), f32
    # tb_ref:    (1, 1, 128)  per-batch (t*w_t + bias - colsum(W_theta)), tiled over P groups
    # w_ref:     (128, 128)   2 * kron(I_P, W_theta^T), f32, resident across the grid
    # out_ref:   (1, td, 128) packed output, f32
    acc = jnp.dot(theta_ref[0], w_ref[...], preferred_element_type=jnp.float32)  # MXU, lane-dense
    out_ref[0] = (acc + tb_ref[0]).astype(out_ref.dtype)


def _round_up(x, m):
    return ((x + m - 1) // m) * m


def bfn_forward_ref(theta, t, weight, bias):
    """Pure-JAX f32 reference mirroring the PyTorch forward exactly."""
    B, D, K = theta.shape
    x = theta * 2.0 - 1.0
    t_col = jnp.broadcast_to(t[:, None, None], (B, D, 1))
    inp = jnp.concatenate([x, t_col], axis=-1)                 # (B, D, K+1)
    return jnp.einsum("bdi,oi->bdo", inp, weight) + bias       # Linear(K+1 -> K)


def bfn_forward(theta, t, weight, bias, *, max_rows_per_step=2048, xla_fallback_rows=16):
    """Pallas implementation of BayesianFlowNetwork.forward.

    theta:  (B, D, K) float32
    t:      (B,)      float32
    weight: (K, K+1)  float32   (nn.Linear(K+1, K).weight)
    bias:   (K,)      float32   (nn.Linear(K+1, K).bias)
    returns (B, D, K) float32
    """
    B, D, K = theta.shape
    theta = theta.astype(jnp.float32)
    t = t.astype(jnp.float32)
    weight = weight.astype(jnp.float32)
    bias = bias.astype(jnp.float32)

    if K > 128 or 128 % K != 0:
        # TODO(synk): dedicated large-K / non-dividing-K Pallas path.
        return bfn_forward_ref(theta, t, weight, bias)

    P = 128 // K                      # logical positions packed per 128-lane row
    Dp = pl.cdiv(D * K, 128)          # packed rows per batch

    if B * Dp < xla_fallback_rows:
        # Tiny problem: pallas_call launch + grid overhead dominates; let XLA fuse it.
        return bfn_forward_ref(theta, t, weight, bias)

    # ---- row-tile selection (td must be a multiple of 8 unless it is the full extent) ----
    td_cap = max(8, _round_up(int(max_rows_per_step), 8))
    if Dp <= td_cap:
        td = Dp                                   # full extent -> always a legal block
        if B == 1 and Dp >= 16:
            td = _round_up(pl.cdiv(Dp, 2), 8)     # >= 2 grid steps so both v7x TCs run
    else:
        td = td_cap
    num_row_tiles = pl.cdiv(Dp, td)               # partial last block: OOB writes masked

    # ---- wrapper-side layout plumbing (views when D*K % 128 == 0) ----
    flat = theta.reshape(B, D * K)
    lane_pad = Dp * 128 - D * K
    if lane_pad:
        # pad is a multiple of K, so padded lanes are whole (discarded) logical positions
        flat = jnp.pad(flat, ((0, 0), (0, lane_pad)))
    theta_packed = flat.reshape(B, Dp, 128)

    # Fold theta*2-1 into the weights:
    #   out = theta_packed @ (2 * kron(I_P, W_theta^T)) + (t*w_t + bias - colsum(W_theta))
    w_theta_T = weight[:, :K].T                                          # (K, K)
    w_big = 2.0 * jnp.kron(jnp.eye(P, dtype=jnp.float32), w_theta_T)     # (128, 128), f32
    w_t = weight[:, K]                                                   # (K,)
    col_sum = jnp.sum(weight[:, :K], axis=1)                             # (K,)
    tb = t[:, None] * w_t[None, :] + bias[None, :] - col_sum[None, :]    # (B, K)
    tb_packed = jnp.tile(tb, (1, P)).reshape(B, 1, 128)                  # (B, 1, 128)

    grid = (B, num_row_tiles)
    cost = pl.CostEstimate(
        flops=2 * B * num_row_tiles * td * 128 * 128,
        transcendentals=0,
        bytes_accessed=(2 * B * Dp * 128 * 4      # theta in + out (f32)
                        + B * 128 * 4             # tb
                        + 128 * 128 * 4))         # resident f32 weight

    out_packed = pl.pallas_call(
        _bfn_forward_kernel,
        out_shape=jax.ShapeDtypeStruct((B, Dp, 128), jnp.float32),
        grid_spec=pltpu.PrefetchScalarGridSpec(
            num_scalar_prefetch=0,
            grid=grid,
            in_specs=[
                pl.BlockSpec((1, td, 128), lambda b, i: (b, i, 0)),   # packed theta
                pl.BlockSpec((1, 1, 128), lambda b, i: (b, 0, 0)),    # per-batch addend
                pl.BlockSpec((128, 128), lambda b, i: (0, 0)),        # resident weight
            ],
            out_specs=pl.BlockSpec((1, td, 128), lambda b, i: (b, i, 0)),
        ),
        compiler_params=pltpu.CompilerParams(
            dimension_semantics=("parallel", "parallel"),
            vmem_limit_bytes=32 * 1024 * 1024),
        cost_estimate=cost,
    )(theta_packed, tb_packed, w_big)

    if lane_pad == 0:
        return out_packed.reshape(B, D, K)        # free row-major view, no extra HBM pass
    # TODO(synk): downstream consumers could take the packed (B, Dp, 128) layout to
    #             avoid this un-pad slice entirely.
    return out_packed.reshape(B, Dp * 128)[:, : D * K].reshape(B, D, K)


if __name__ == "__main__":
    key = jax.random.PRNGKey(0)
    key_a, key_b = jax.random.split(key)

    def make_inputs(k, B, D, K):
        k_theta, k_t, k_w, k_b = jax.random.split(k, 4)
        logits = jax.random.normal(k_theta, (B, D, K), dtype=jnp.float32)
        theta = jax.nn.softmax(logits, axis=-1)      # categorical distribution per position
        t = jax.random.uniform(k_t, (B,), dtype=jnp.float32)
        fan_in = K + 1                               # nn.Linear(K+1, K)-style init
        bound = 1.0 / float(fan_in) ** 0.5
        weight = jax.random.uniform(k_w, (K, K + 1), jnp.float32, -bound, bound)
        bias = jax.random.uniform(k_b, (K,), jnp.float32, -bound, bound)
        return theta, t, weight, bias

    # Case 1: D*K divisible by 128 -> pad-free, pure-view packing (kernel path).
    B, D, K = 2, 256, 16
    theta, t, weight, bias = make_inputs(key_a, B, D, K)
    out = jax.block_until_ready(bfn_forward(theta, t, weight, bias, xla_fallback_rows=0))
    ref = bfn_forward_ref(theta, t, weight, bias)
    assert out.shape == (B, D, K)
    assert jnp.allclose(out, ref, atol=1e-4, rtol=1e-4), "mismatch vs f32 reference (case 1)"

    # Case 2: D*K not divisible by 128 -> padded lane tail, still a single kernel pass.
    B2, D2, K2 = 2, 100, 16
    theta2, t2, weight2, bias2 = make_inputs(key_b, B2, D2, K2)
    out2 = jax.block_until_ready(
        bfn_forward(theta2, t2, weight2, bias2, xla_fallback_rows=0))
    ref2 = bfn_forward_ref(theta2, t2, weight2, bias2)
    assert out2.shape == (B2, D2, K2)
    assert jnp.allclose(out2, ref2, atol=1e-4, rtol=1e-4), "mismatch vs f32 reference (case 2)"

    print("KERNEL_OK")
</pallas_src>

<mosaic_0001>
module attributes {stable_mosaic.version = 11 : i64} {
  func.func @_bfn_forward_kernel(%arg0: i32, %arg1: i32, %arg2: memref<1x32x128xf32, #tpu.memory_space<vmem>>, %arg3: memref<1x1x128xf32, #tpu.memory_space<vmem>>, %arg4: memref<128x128xf32, #tpu.memory_space<vmem>>, %arg5: memref<1x32x128xf32, #tpu.memory_space<vmem>>) attributes {dimension_semantics = [#tpu.dimension_semantics<parallel>, #tpu.dimension_semantics<parallel>], iteration_bounds = array<i64: 2, 1>, scalar_prefetch = 0 : i64, scratch_operands = 0 : i64, tpu.core_type = #tpu.core_type<tc>, window_params = [{transform_indices = @transform_0, window_bounds = array<i64: 1, 32, 128>}, {transform_indices = @transform_1, window_bounds = array<i64: 1, 1, 128>}, {pipeline_mode = #tpu.pipeline_mode<synchronous>, transform_indices = @transform_2, window_bounds = array<i64: 128, 128>}, {transform_indices = @transform_3, window_bounds = array<i64: 1, 32, 128>}]} {
    %c0 = arith.constant 0 : index
    %c0_0 = arith.constant 0 : index
    %c0_1 = arith.constant 0 : index
    %0 = vector.load %arg2[%c0, %c0_0, %c0_1] : memref<1x32x128xf32, #tpu.memory_space<vmem>>, vector<1x32x128xf32>
    %1 = vector.shape_cast %0 : vector<1x32x128xf32> to vector<32x128xf32>
    %c0_2 = arith.constant 0 : index
    %c0_3 = arith.constant 0 : index
    %2 = vector.load %arg4[%c0_2, %c0_3] : memref<128x128xf32, #tpu.memory_space<vmem>>, vector<128x128xf32>
    %cst = arith.constant dense<0.000000e+00> : vector<32x128xf32>
    %3 = tpu.matmul %1, %2, %cst {dimension_numbers = #tpu.dot_dimension_numbers<[1], [0], [0], [1], [0, 0, 1, 1], [], []>} : vector<32x128xf32>, vector<128x128xf32>, vector<32x128xf32> -> vector<32x128xf32>
    %c0_4 = arith.constant 0 : index
    %c0_5 = arith.constant 0 : index
    %c0_6 = arith.constant 0 : index
    %4 = vector.load %arg3[%c0_4, %c0_5, %c0_6] : memref<1x1x128xf32, #tpu.memory_space<vmem>>, vector<1x1x128xf32>
    %5 = vector.shape_cast %4 : vector<1x1x128xf32> to vector<1x128xf32>
    %6 = vector.broadcast %5 : vector<1x128xf32> to vector<32x128xf32>
    %7 = arith.addf %3, %6 : vector<32x128xf32>
    %c0_7 = arith.constant 0 : index
    %c0_8 = arith.constant 0 : index
    %c0_9 = arith.constant 0 : index
    %8 = vector.load %arg5[%c0_7, %c0_8, %c0_9] : memref<1x32x128xf32, #tpu.memory_space<vmem>>, vector<1x32x128xf32>
    %9 = vector.shape_cast %8 : vector<1x32x128xf32> to vector<32x128xf32>
    %10 = vector.shape_cast %7 : vector<32x128xf32> to vector<1x32x128xf32>
    tpu.vector_store %arg5[%c0_7, %c0_8, %c0_9], %10 {strides = array<i32>} : memref<1x32x128xf32, #tpu.memory_space<vmem>>, vector<1x32x128xf32>,
    return
  }
  func.func @transform_0(%arg0: i32, %arg1: i32) -> (i32, i32, i32) {
    %c0_i32 = arith.constant 0 : i32
    %c0_i32_0 = arith.constant 0 : i32
    return %arg0, %arg1, %c0_i32 : i32, i32, i32
  }
  func.func @transform_1(%arg0: i32, %arg1: i32) -> (i32, i32, i32) {
    %c0_i32 = arith.constant 0 : i32
    %c0_i32_0 = arith.constant 0 : i32
    %c0_i32_1 = arith.constant 0 : i32
    return %arg0, %c0_i32, %c0_i32_0 : i32, i32, i32
  }
  func.func @transform_2(%arg0: i32, %arg1: i32) -> (i32, i32) {
    %c0_i32 = arith.constant 0 : i32
    %c0_i32_0 = arith.constant 0 : i32
    %c0_i32_1 = arith.constant 0 : i32
    return %c0_i32, %c0_i32_0 : i32, i32
  }
  func.func @transform_3(%arg0: i32, %arg1: i32) -> (i32, i32, i32) {
    %c0_i32 = arith.constant 0 : i32
    %c0_i32_0 = arith.constant 0 : i32
    return %arg0, %arg1, %c0_i32 : i32, i32, i32
  }
}

</mosaic_0001>

<llo_original>
// kernel: tpu_custom_call.1
$region0: #{tpu_custom_call.1}
  #allocation0 [shape = 'u32[]', space=smem, size = 0x4, offset = 0x4, fixed_abs, tag = 'smem constant byte address 0x4 - core index']
  #allocation1 [shape = 'u32[144,128]{1,0:T(1,128)}', space=vmem, size = 0x12000, scoped, tag = 'internal scratch']
  %s0 = inlined_call_operand.hbm [shape: f32[2,32,128], index: 0, kind: input, shape index: {}]
  %s1 = inlined_call_operand.vmem [shape: f32[2,1,128], index: 1, kind: input, shape index: {}]
  %s2 = inlined_call_operand.hbm [shape: f32[128,128], index: 2, kind: input, shape index: {}]
  %s3 = inlined_call_operand.hbm [shape: f32[2,32,128], index: 3, kind: output, shape index: {}]
  %s4 = sld [smem:[#allocation0]]
  $region53: #{tpu_custom_call.1} parent=0
    _
  %s6 = ssub.s32 1, %s4
  %s7 = scalar_select 0, %s6, %s4
  $region1: #{tpu_custom_call.1} parent=0
    #allocation2 [shape = 'u8[32768]{0}', space=vmem, size = 0x8000, scoped, tag = 'input window, operand 0']
    #allocation3 [shape = 's32[2]{0}', space=sflag, size = 0x8, scoped, tag = 'scoped memory for tpu_custom_call.1']
    #allocation4 [shape = 's32[2]{0}', space=sflag, size = 0x8, scoped, tag = 'scoped memory for tpu_custom_call.1']
    #allocation5 [shape = 'u8[65536]{0}', space=vmem, size = 0x10000, scoped, tag = 'input window, operand 2, single buffered']
    #allocation6 [shape = 's32[1]{0}', space=sflag, size = 0x4, scoped, tag = 'scoped memory for tpu_custom_call.1']
    #allocation7 [shape = 'u8[32768]{0}', space=vmem, size = 0x8000, scoped, tag = 'output window, operand 0']
    %8 = vsyncpa [#allocation3], 0
    %s9 = scalar_lea.sflag [#allocation3], 1
    %10 = vsyncpa %s9, 0
    %11 = vsyncpa [#allocation6], 0
    %12 = vsyncpa [#allocation4], 0
    %s13 = scalar_lea.sflag [#allocation4], 1
    %14 = vsyncpa %s13, 0
    loop: start=0, step=1, limit=4
    $region2: #{tpu_custom_call.1} parent=1 // loop_pre_header
      _
    $region3: #{tpu_custom_call.1} parent=1 // loop_header
      %s16 = sphi 0, %s20
      %p17 = scmp.ge.s32.totalorder %s16, 4
      %s23 = sphi 0, %s35
      %s24 = sphi 0, %s31
      %s25 = sphi 0, %s23
      %s26 = sphi 0, %s24
      %s27 = sphi 0, %s25
      %s28 = sphi 0, %s26
      %s40 = sphi 0, %s42
      %s43 = sphi 0, %s40
      %s44 = sphi 0, %s43
      %s60 = sphi 0, %s44
      %s66 = sphi 0, %s68
      %s69 = sphi 0, %s66
      %s70 = sphi 0, %s69
      %s86 = sphi 0, %s70
      %s90 = sphi 0, %s90
      %s92 = sphi 0, %s90
      %s93 = sphi 0, %s92
      %s107 = sphi 0, %s93
      %s115 = sphi 0, %s117
      %s118 = sphi 0, %s115
      %s119 = sphi 0, %s118
      %s135 = sphi 0, %s119
    $region4: #{tpu_custom_call.1} parent=1 // loop_header_branch
      %19 = sbr.rel (%p17) target = $region8
    $region5: #{tpu_custom_call.1} parent=1 // loop_body
      %s21 = ssub.s32 %s16, 1
      %s22 = ssub.s32 %s16, 2
      %s29 = sadd.s32 1, %s24
      %p30 = scmp.ge.s32.totalorder %s29, 1
      %s31 = scalar_select %p30, 0, %s29
      %s32 = sadd.s32 1, %s23
      %s33 = scalar_select %p30, %s32, %s23
      %p34 = scmp.ge.s32.totalorder %s33, 2
      %s35 = scalar_select %p34, 0, %s33
      %s36 = ssub.s32 %s23, %s35
      %s37 = ssub.s32 %s24, %s31
      %s38 = sor.u32 %s36, %s37
      %p39 = scmp.eq.s32.totalorder %s38, 0
      %s41 = sadd.s32 %s40, 1
      %s42 = scalar_select %p39, %s40, %s41
      %p45 = pneg %p39
      %p46 = scmp.eq.s32.totalorder %s16, 1
      %p47 = por %p45, %p46
      %p48 = scmp.ne.s32.totalorder %s40, %s43
      %p49 = scmp.eq.s32.totalorder %s16, 0
      %p50 = por %p48, %p49
      %p51 = scmp.ne.s32.totalorder %s40, %s43
      %p52 = scmp.eq.s32.totalorder %s21, 1
      %p53 = por %p51, %p52
      %p54 = scmp.ne.s32.totalorder %s43, %s44
      %p55 = scmp.eq.s32.totalorder %s21, 0
      %p56 = por %p54, %p55
      %p57 = scmp.ne.s32.totalorder %s43, %s44
      %p58 = scmp.eq.s32.totalorder %s22, 1
      %p59 = por %p57, %p58
      %p61 = scmp.ne.s32.totalorder %s44, %s60
      %p62 = scmp.eq.s32.totalorder %s22, 0
      %p63 = por %p61, %p62
      %s64 = ssub.s32 %s23, %s35
      %p65 = scmp.eq.s32.totalorder %s64, 0
      %s67 = sadd.s32 %s66, 1
      %s68 = scalar_select %p65, %s66, %s67
      %p71 = pneg %p65
      %p72 = scmp.eq.s32.totalorder %s16, 1
      %p73 = por %p71, %p72
      %p74 = scmp.ne.s32.totalorder %s66, %s69
      %p75 = scmp.eq.s32.totalorder %s16, 0
      %p76 = por %p74, %p75
      %p77 = scmp.ne.s32.totalorder %s66, %s69
      %p78 = scmp.eq.s32.totalorder %s21, 1
      %p79 = por %p77, %p78
      %p80 = scmp.ne.s32.totalorder %s69, %s70
      %p81 = scmp.eq.s32.totalorder %s21, 0
      %p82 = por %p80, %p81
      %p83 = scmp.ne.s32.totalorder %s69, %s70
      %p84 = scmp.eq.s32.totalorder %s22, 1
      %p85 = por %p83, %p84
      %p87 = scmp.ne.s32.totalorder %s70, %s86
      %p88 = scmp.eq.s32.totalorder %s22, 0
      %p89 = por %p87, %p88
      %s91 = sadd.s32 %s90, 1
      %p94 = scmp.eq.s32.totalorder %s16, 1
      %p95 = scmp.ne.s32.totalorder %s90, %s92
      %p96 = scmp.eq.s32.totalorder %s16, 0
      %p97 = por %p95, %p96
      %p98 = scmp.ne.s32.totalorder %s90, %s92
      %p99 = scmp.eq.s32.totalorder %s21, 1
      %p100 = por %p98, %p99
      %p101 = scmp.ne.s32.totalorder %s92, %s93
      %p102 = scmp.eq.s32.totalorder %s21, 0
      %p103 = por %p101, %p102
      %p104 = scmp.ne.s32.totalorder %s92, %s93
      %p105 = scmp.eq.s32.totalorder %s22, 1
      %p106 = por %p104, %p105
      %p108 = scmp.ne.s32.totalorder %s93, %s107
      %p109 = scmp.eq.s32.totalorder %s22, 0
      %p110 = por %p108, %p109
      %s111 = ssub.s32 %s23, %s35
      %s112 = ssub.s32 %s24, %s31
      %s113 = sor.u32 %s111, %s112
      %p114 = scmp.eq.s32.totalorder %s113, 0
      %s116 = sadd.s32 %s115, 1
      %s117 = scalar_select %p114, %s115, %s116
      %p120 = pneg %p114
      %p121 = scmp.eq.s32.totalorder %s16, 1
      %p122 = por %p120, %p121
      %p123 = scmp.ne.s32.totalorder %s115, %s118
      %p124 = scmp.eq.s32.totalorder %s16, 0
      %p125 = por %p123, %p124
      %p126 = scmp.ne.s32.totalorder %s115, %s118
      %p127 = scmp.eq.s32.totalorder %s21, 1
      %p128 = por %p126, %p127
      %p129 = scmp.ne.s32.totalorder %s118, %s119
      %p130 = scmp.eq.s32.totalorder %s21, 0
      %p131 = por %p129, %p130
      %p132 = scmp.ne.s32.totalorder %s118, %s119
      %p133 = scmp.eq.s32.totalorder %s22, 1
      %p134 = por %p132, %p133
      %p136 = scmp.ne.s32.totalorder %s119, %s135
      %p137 = scmp.eq.s32.totalorder %s22, 0
      %p138 = por %p136, %p137
      %p139 = scmp.le.s32.totalorder 1, %s16
      %p140 = scmp.lt.s32.totalorder %s16, 3
      %p141 = pnand %p139, %p140
      %p142 = pneg %p141
      // Predicated region
      $region9: #{tpu_custom_call.1} parent=5 // pred_check
        _
      $region10: #{tpu_custom_call.1} parent=5 // pred_check_branch
        %144 = sbr.rel (%p141) target = $region12
      $region11: #{tpu_custom_call.1} parent=5 // pred_region
        %s145 = ssub.s32 %s16, 1
        // Predicated region
        $region13: #{tpu_custom_call.1} parent=11 // pred_check
          %p146 = pneg %p103
        $region14: #{tpu_custom_call.1} parent=11 // pred_check_branch
          %148 = sbr.rel (%p146) target = $region16
        $region15: #{tpu_custom_call.1} parent=11 // pred_region
          %s150 = ssub.s32 2048, 2048
          %151 = vsyncadd [#allocation6], %s150
          %s152 = sshll.u32 [#allocation5], 4
          %s153 = int_to_ptr.vmem [resolvable:$true] %s152
          %158 = dma.hbm_to_vmem [thread:$0]  %s2, 2048, %s153, [#allocation6], 128, 128, 8
        $region16: #{tpu_custom_call.1} parent=11 // pred_fallthru
          _
      $region12: #{tpu_custom_call.1} parent=5 // pred_fallthru
        _
      %p159 = scmp.lt.s32.totalorder %s16, 2
      // Predicated region
      $region17: #{tpu_custom_call.1} parent=5 // pred_check
        %p160 = pneg %p159
      $region18: #{tpu_custom_call.1} parent=5 // pred_check_branch
        %162 = sbr.rel (%p160) target = $region20
      $region19: #{tpu_custom_call.1} parent=5 // pred_region
        // Predicated region
        $region21: #{tpu_custom_call.1} parent=19 // pred_check
          %p163 = pneg %p50
        $region22: #{tpu_custom_call.1} parent=19 // pred_check_branch
          %165 = sbr.rel (%p163) target = $region24
        $region23: #{tpu_custom_call.1} parent=19 // pred_region
          %s166 = sand.u32 %s40, 1
          %s167 = scalar_lea.sflag [#allocation3], %s166
          %s168 = sand.u32 %s40, 1
          %s169 = smul.addr %s168, 32
          %s170 = scalar_lea.vmem [#allocation2], %s169
          %s171 = smul.u32 4, %s24
          %s173 = ssub.s32 512, 512
          %174 = vsyncadd %s167, %s173
          %s175 = smul.addr %s23, 4
          %s176 = sadd.s32 %s171, %s175
          %s177 = smul.addr %s176, 128
          %s178 = scalar_lea.hbm %s0, %s177
          %s179 = sshll.u32 %s170, 4
          %s180 = int_to_ptr.vmem [resolvable:$true] %s179
          %185 = dma.hbm_to_vmem [thread:$0]  %s178, 512, %s180, %s167, 128, 128, 8
        $region24: #{tpu_custom_call.1} parent=19 // pred_fallthru
          _
        // Predicated region
        $region25: #{tpu_custom_call.1} parent=19 // pred_check
          %p186 = pneg %p76
        $region26: #{tpu_custom_call.1} parent=19 // pred_check_branch
          %188 = sbr.rel (%p186) target = $region28
        $region27: #{tpu_custom_call.1} parent=19 // pred_region
          %p189 = scmp.lt.s32.totalorder %s23, 1
          %s190 = scalar_select %p189, %s23, 1
          %s191 = scalar_lea.vmem %s1, %s190
        $region28: #{tpu_custom_call.1} parent=19 // pred_fallthru
          _
      $region20: #{tpu_custom_call.1} parent=5 // pred_fallthru
        _
      %p192 = scmp.le.s32.totalorder 1, %s16
      %p193 = scmp.lt.s32.totalorder %s16, 3
      %p194 = pnand %p192, %p193
      %p195 = pneg %p194
      // Predicated region
      $region29: #{tpu_custom_call.1} parent=5 // pred_check
        _
      $region30: #{tpu_custom_call.1} parent=5 // pred_check_branch
        %197 = sbr.rel (%p194) target = $region32
      $region31: #{tpu_custom_call.1} parent=5 // pred_region
        %s198 = ssub.s32 %s16, 1
        %s199 = sand.u32 %s43, 1
        %s200 = scalar_lea.sflag [#allocation3], %s199
        %s201 = sand.u32 %s43, 1
        %s202 = smul.addr %s201, 32
        %s203 = scalar_lea.vmem [#allocation2], %s202
        // Predicated region
        $region33: #{tpu_custom_call.1} parent=31 // pred_check
          %p204 = pneg %p56
        $region34: #{tpu_custom_call.1} parent=31 // pred_check_branch
          %206 = sbr.rel (%p204) target = $region36
        $region35: #{tpu_custom_call.1} parent=31 // pred_region
          %207 = dma.done %s200, 512
        $region36: #{tpu_custom_call.1} parent=31 // pred_fallthru
          _
        // Predicated region
        $region37: #{tpu_custom_call.1} parent=31 // pred_check
          %p208 = pneg %p103
        $region38: #{tpu_custom_call.1} parent=31 // pred_check_branch
          %210 = sbr.rel (%p208) target = $region40
        $region39: #{tpu_custom_call.1} parent=31 // pred_region
          %211 = dma.done [#allocation6], 2048
        $region40: #{tpu_custom_call.1} parent=31 // pred_fallthru
          _
        %s212 = sand.u32 %s43, 1
        %s213 = scalar_lea.sflag [#allocation3], %s212
        %s214 = sand.u32 %s43, 1
        %s215 = smul.addr %s214, 32
        %s216 = scalar_lea.vmem [#allocation2], %s215
        %p217 = pneg %p56
        %p218 = pneg %p53
        %p219 = scmp.lt.s32.totalorder %s25, 1
        %s220 = scalar_select %p219, %s25, 1
        %s221 = scalar_lea.vmem %s1, %s220
        %p222 = pneg %p82
        %p223 = pneg %p79
        %p224 = pneg %p103
        %p225 = pneg %p100
        %p226 = pneg %p131
        %p227 = pneg %p128
        %s228 = sand.u32 %s118, 1
        %s229 = scalar_lea.sflag [#allocation4], %s228
        %s230 = sand.u32 %s118, 1
        %s231 = smul.addr %s230, 32
        %s232 = scalar_lea.vmem [#allocation7], %s231
        %s233 = smul.u32 4, %s26
        %p234 = scmp.lt.s32.totalorder %s25, 1
        %s235 = scalar_select %p234, %s25, 1
        %s236 = scalar_lea.vmem %s1, %s235
        %s237 = smul.u32 4, %s26
        %v238 = vld [vmem:[%s203] sm:$0xff]
        %v239 = vld [vmem:[%s203 + $0x8] sm:$0xff]
        %v240 = vld [vmem:[%s203 + $0x10] sm:$0xff]
        %v241 = vld [vmem:[%s203 + $0x18] sm:$0xff]
        %v242 = vld [vmem:[#allocation5] sm:$0xff]
        %v243 = vld [vmem:[#allocation5 + $0x8] sm:$0xff]
        %v244 = vld [vmem:[#allocation5 + $0x10] sm:$0xff]
        %v245 = vld [vmem:[#allocation5 + $0x18] sm:$0xff]
        %v246 = vld [vmem:[#allocation5 + $0x20] sm:$0xff]
        %v247 = vld [vmem:[#allocation5 + $0x28] sm:$0xff]
        %v248 = vld [vmem:[#allocation5 + $0x30] sm:$0xff]
        %v249 = vld [vmem:[#allocation5 + $0x38] sm:$0xff]
        %v250 = vld [vmem:[#allocation5 + $0x40] sm:$0xff]
        %v251 = vld [vmem:[#allocation5 + $0x48] sm:$0xff]
        %v252 = vld [vmem:[#allocation5 + $0x50] sm:$0xff]
        %v253 = vld [vmem:[#allocation5 + $0x58] sm:$0xff]
        %v254 = vld [vmem:[#allocation5 + $0x60] sm:$0xff]
        %v255 = vld [vmem:[#allocation5 + $0x68] sm:$0xff]
        %v256 = vld [vmem:[#allocation5 + $0x70] sm:$0xff]
        %v257 = vld [vmem:[#allocation5 + $0x78] sm:$0xff]
        %v258 = vld [vmem:[%s236] sm:$0x1]
        %v260 = vlaneseq
        %v261 = vshrl.u32 %v260, 7
        %v262 = vsub.s32 0, %v261
        %v263 = vrot.slane %v258, %v262
        %265 = vmatprep.subr.mxu0 0.0
        %266 = vmatpush1.msra.mxu0 %v242
        %267 = vmatprep.subr.mxu0 0.0
        %268 = vmatpush1.msra.mxu0 %v243
        %269 = vmatprep.subr.mxu0 0.0
        %270 = vmatpush1.msra.mxu0 %v244
        %271 = vmatprep.subr.mxu0 0.0
        %272 = vmatpush1.msra.mxu0 %v245
        %273 = vmatprep.subr.mxu0 0.0
        %274 = vmatpush1.msra.mxu0 %v246
        %275 = vmatprep.subr.mxu0 0.0
        %276 = vmatpush1.msra.mxu0 %v247
        %277 = vmatprep.subr.mxu0 0.0
        %278 = vmatpush1.msra.mxu0 %v248
        %279 = vmatprep.subr.mxu0 0.0
        %280 = vmatpush1.msra.mxu0 %v249
        %281 = vmatprep.subr.mxu0 0.0
        %282 = vmatpush1.msra.mxu0 %v250
        %283 = vmatprep.subr.mxu0 0.0
        %284 = vmatpush1.msra.mxu0 %v251
        %285 = vmatprep.subr.mxu0 0.0
        %286 = vmatpush1.msra.mxu0 %v252
        %287 = vmatprep.subr.mxu0 0.0
        %288 = vmatpush1.msra.mxu0 %v253
        %289 = vmatprep.subr.mxu0 0.0
        %290 = vmatpush1.msra.mxu0 %v254
        %291 = vmatprep.subr.mxu0 0.0
        %292 = vmatpush1.msra.mxu0 %v255
        %293 = vmatprep.subr.mxu0 0.0
        %294 = vmatpush1.msra.mxu0 %v256
        %295 = vmatprep.subr.mxu0 0.0
        %296 = vmatpush1.msra.mxu0 %v257
        %297 = vmatprep.subr.mxu0 0.0
        %298 = vmatpush1.msra.mxu0 0.0
        %299 = vmatprep.subr.mxu0 0.0
        %300 = vmatpush1.msra.mxu0 0.0
        %301 = vmatprep.subr.mxu0 0.0
        %302 = vmatpush1.msra.mxu0 0.0
        %303 = vmatprep.subr.mxu0 0.0
        %304 = vmatpush1.msra.mxu0 0.0
        %305 = vmatprep.subr.mxu0 0.0
        %306 = vmatpush1.msra.mxu0 0.0
        %307 = vmatprep.subr.mxu0 0.0
        %308 = vmatpush1.msra.mxu0 0.0
        %309 = vmatprep.subr.mxu0 0.0
        %310 = vmatpush1.msra.mxu0 0.0
        %311 = vmatprep.subr.mxu0 0.0
        %312 = vmatpush1.msra.mxu0 0.0
        %313 = vmatprep.subr.mxu0 0.0
        %314 = vmatpush1.msra.mxu0 0.0
        %315 = vmatprep.subr.mxu0 0.0
        %316 = vmatpush1.msra.mxu0 0.0
        %317 = vmatprep.subr.mxu0 0.0
        %318 = vmatpush1.msra.mxu0 0.0
        %319 = vmatprep.subr.mxu0 0.0
        %320 = vmatpush1.msra.mxu0 0.0
        %321 = vmatprep.subr.mxu0 0.0
        %322 = vmatpush1.msra.mxu0 0.0
        %323 = vmatprep.subr.mxu0 0.0
        %324 = vmatpush1.msra.mxu0 0.0
        %325 = vmatprep.subr.mxu0 0.0
        %326 = vmatpush1.msra.mxu0 0.0
        %327 = vmatprep.subr.mxu0 0.0
        %328 = vmatpush1.msra.mxu0 0.0
        %329 = vmatprep.mubr.f32.mxu0 0.0
        %330 = vmatmul.mubr.f32.gmra.mrb[0].mxu0 %v238
        %v331 = vpop.f32.mrb[0].mxu0
        %v332 = vadd.f32 %v263, %v331
        %v333 = vpop.f32.mrb[0].mxu0
        %334 = vmatprep.mubr.f32.mxu0 0.0
        %335 = vmatmul.mubr.f32.gmra.mrb[0].mxu0 %v239
        %v336 = vpop.f32.mrb[0].mxu0
        %v337 = vadd.f32 %v263, %v336
        %v338 = vpop.f32.mrb[0].mxu0
        %339 = vmatprep.mubr.f32.mxu0 0.0
        %340 = vmatmul.mubr.f32.gmra.mrb[0].mxu0 %v240
        %v341 = vpop.f32.mrb[0].mxu0
        %v342 = vadd.f32 %v263, %v341
        %v343 = vpop.f32.mrb[0].mxu0
        %344 = vmatprep.mubr.f32.mxu0 0.0
        %345 = vmatmul.mubr.f32.gmra.mrb[0].mxu0 %v241
        %v346 = vpop.f32.mrb[0].mxu0
        %v347 = vadd.f32 %v263, %v346
        %v348 = vpop.f32.mrb[0].mxu0
        %349 = vdwg.mxu0
        %350 = vst [vmem:[%s232] sm:$0xff] %v332
        %351 = vst [vmem:[%s232 + $0x8] sm:$0xff] %v337
        %352 = vst [vmem:[%s232 + $0x10] sm:$0xff] %v342
        %353 = vst [vmem:[%s232 + $0x18] sm:$0xff] %v347
        %s354 = sand.u32 %s118, 1
        %s355 = scalar_lea.sflag [#allocation4], %s354
        %s356 = sand.u32 %s118, 1
        %s357 = smul.addr %s356, 32
        %s358 = scalar_lea.vmem [#allocation7], %s357
        // Predicated region
        $region41: #{tpu_custom_call.1} parent=31 // pred_check
          %p359 = pneg %p128
        $region42: #{tpu_custom_call.1} parent=31 // pred_check_branch
          %361 = sbr.rel (%p359) target = $region44
        $region43: #{tpu_custom_call.1} parent=31 // pred_region
          %s362 = smul.u32 4, %s26
          %s364 = ssub.s32 512, 512
          %365 = vsyncadd %s355, %s364
          %s366 = smul.addr %s25, 4
          %s367 = sadd.s32 %s362, %s366
          %s368 = smul.addr %s367, 128
          %s369 = scalar_lea.hbm %s3, %s368
          %s370 = sshll.u32 %s358, 4
          %s371 = int_to_ptr.vmem [resolvable:$true] %s370
          %376 = dma.vmem_to_hbm [thread:$0]  %s371, 512, %s369, %s355, 128, 128, 8
        $region44: #{tpu_custom_call.1} parent=31 // pred_fallthru
          _
      $region32: #{tpu_custom_call.1} parent=5 // pred_fallthru
        _
      %p377 = scmp.le.s32.totalorder 2, %s16
      // Predicated region
      $region45: #{tpu_custom_call.1} parent=5 // pred_check
        %p378 = pneg %p377
      $region46: #{tpu_custom_call.1} parent=5 // pred_check_branch
        %380 = sbr.rel (%p378) target = $region48
      $region47: #{tpu_custom_call.1} parent=5 // pred_region
        %s381 = ssub.s32 %s16, 2
        // Predicated region
        $region49: #{tpu_custom_call.1} parent=47 // pred_check
          %p382 = pneg %p134
        $region50: #{tpu_custom_call.1} parent=47 // pred_check_branch
          %384 = sbr.rel (%p382) target = $region52
        $region51: #{tpu_custom_call.1} parent=47 // pred_region
          %s385 = sand.u32 %s119, 1
          %s386 = scalar_lea.sflag [#allocation4], %s385
          %s387 = sand.u32 %s119, 1
          %s388 = smul.addr %s387, 32
          %s389 = scalar_lea.vmem [#allocation7], %s388
          %390 = dma.done %s386, 512
        $region52: #{tpu_custom_call.1} parent=47 // pred_fallthru
          _
      $region48: #{tpu_custom_call.1} parent=5 // pred_fallthru
        _
    $region6: #{tpu_custom_call.1} parent=1 // loop_footer
      %s20 = sadd.s32 1, %s16
    $region7: #{tpu_custom_call.1} parent=1 // loop_footer_branch
      %15 = sbr.rel target = $region3
    $region8: #{tpu_custom_call.1} parent=1 // loop_exit
      _
    %391 = vsyncpa [#allocation3], 1
    %s392 = scalar_lea.sflag [#allocation3], 1
    %393 = vsyncpa %s392, 1
    %394 = vsyncpa [#allocation6], 1
    %395 = vsyncpa [#allocation4], 1
    %s396 = scalar_lea.sflag [#allocation4], 1
    %397 = vsyncpa %s396, 1

</llo_original>
